<compile_context>
chip_gen: v5e
topology: v5e:2x2
jax: 0.10.0
libtpu: 0.0.40
codegen_flags: <defaults>
</compile_context>

<pallas_src>
import functools

import jax
import jax.numpy as jnp
import numpy as np
from jax.experimental import pallas as pl
from jax.experimental.pallas import tpu as pltpu


def _round_up(x, m):
    return (x + m - 1) // m * m


# ---------------------------------------------------------------------------
# Pallas kernels: GEMM + fused bias (+ optional ReLU)
# ---------------------------------------------------------------------------
def _mm_kernel_single(act, x_ref, w_ref, b_ref, o_ref):
    # Single K block: one MXU pass, fused epilogue, no scratch / no pl.when.
    out = jnp.dot(x_ref[...], w_ref[...], preferred_element_type=jnp.float32)
    out = out + b_ref[...]
    if act == "relu":
        out = jnp.maximum(out, 0.0)
    o_ref[...] = out.astype(o_ref.dtype)


def _mm_kernel_ktiled(act, x_ref, w_ref, b_ref, o_ref, acc_ref):
    # Fallback for very large K only (not used by the shapes in this script).
    k = pl.program_id(2)

    @pl.when(k == 0)
    def _():
        acc_ref[...] = jnp.zeros_like(acc_ref)

    acc_ref[...] += jnp.dot(
        x_ref[...], w_ref[...], preferred_element_type=jnp.float32
    )

    @pl.when(k == pl.num_programs(2) - 1)
    def _():
        out = acc_ref[...] + b_ref[...]
        if act == "relu":
            out = jnp.maximum(out, 0.0)
        o_ref[...] = out.astype(o_ref.dtype)


_K_SINGLE_MAX = 2048  # single K block (no accumulator) when K <= this


def matmul_bias_act(x, w, b, act=None):
    """out = act(x @ w + b) computed with a Pallas TPU kernel (f32)."""
    M, K = x.shape
    K2, N = w.shape
    assert K == K2, (K, K2)
    b2 = b.reshape(1, N)

    # Tile (and pad) only when a dim is genuinely large; otherwise use the full
    # dim as the block (block == full array dim is always legal -> no padding).
    tm = M if M <= 512 else 256
    tn = N if N <= 512 else 256
    Mp = _round_up(M, tm)
    Np = _round_up(N, tn)

    xp = x if Mp == M else jnp.pad(x, ((0, Mp - M), (0, 0)))
    wp = w if Np == N else jnp.pad(w, ((0, 0), (0, Np - N)))
    bp = b2 if Np == N else jnp.pad(b2, ((0, 0), (0, Np - N)))

    if K <= _K_SINGLE_MAX:
        out = pl.pallas_call(
            functools.partial(_mm_kernel_single, act),
            out_shape=jax.ShapeDtypeStruct((Mp, Np), x.dtype),
            grid=(Mp // tm, Np // tn),
            in_specs=[
                pl.BlockSpec((tm, K), lambda i, j: (i, 0)),
                pl.BlockSpec((K, tn), lambda i, j: (0, j)),
                pl.BlockSpec((1, tn), lambda i, j: (0, j)),
            ],
            out_specs=pl.BlockSpec((tm, tn), lambda i, j: (i, j)),
            compiler_params=pltpu.CompilerParams(
                dimension_semantics=("parallel", "parallel")
            ),
        )(xp, wp, bp)
    else:
        tk = 1024
        Kp = _round_up(K, tk)
        xp = jnp.pad(xp, ((0, 0), (0, Kp - K)))
        wp = jnp.pad(wp, ((0, Kp - K), (0, 0)))
        out = pl.pallas_call(
            functools.partial(_mm_kernel_ktiled, act),
            out_shape=jax.ShapeDtypeStruct((Mp, Np), x.dtype),
            grid=(Mp // tm, Np // tn, Kp // tk),
            in_specs=[
                pl.BlockSpec((tm, tk), lambda i, j, k: (i, k)),
                pl.BlockSpec((tk, tn), lambda i, j, k: (k, j)),
                pl.BlockSpec((1, tn), lambda i, j, k: (0, j)),
            ],
            out_specs=pl.BlockSpec((tm, tn), lambda i, j, k: (i, j)),
            scratch_shapes=[pltpu.VMEM((tm, tn), jnp.float32)],
            compiler_params=pltpu.CompilerParams(
                dimension_semantics=("parallel", "parallel", "arbitrary")
            ),
        )(xp, wp, bp)

    if Mp != M or Np != N:
        out = out[:M, :N]
    return out


# ---------------------------------------------------------------------------
# Fused FC tail: regress_layer + hidden fc layers (ReLU) + last_fc, ONE kernel
# ---------------------------------------------------------------------------
def _fc_head_kernel(n_hidden, *refs):
    x_ref = refs[0]
    reg_w_ref, reg_b_ref = refs[1], refs[2]
    off = 3
    hidden_refs = refs[off : off + 2 * n_hidden]
    off += 2 * n_hidden
    last_w_ref, last_b_ref = refs[off], refs[off + 1]
    out_last_ref, out_reg_ref = refs[off + 2], refs[off + 3]

    x = x_ref[...]

    # regress_layer(flat)  -- applied to the raw flattened conv features
    reg = jnp.dot(x, reg_w_ref[...], preferred_element_type=jnp.float32)
    out_reg_ref[...] = (reg + reg_b_ref[...]).astype(out_reg_ref.dtype)

    # hidden fc layers with ReLU (apply_forward_fc)
    h = x
    for i in range(n_hidden):
        w = hidden_refs[2 * i][...]
        b = hidden_refs[2 * i + 1][...]
        h = jnp.dot(h, w, preferred_element_type=jnp.float32) + b
        h = jnp.maximum(h, 0.0)

    # last_fc, identity output activation
    out = jnp.dot(h, last_w_ref[...], preferred_element_type=jnp.float32)
    out_last_ref[...] = (out + last_b_ref[...]).astype(out_last_ref.dtype)


def fc_head(flat, reg_w, reg_b, fc_ws, fc_bs, last_w, last_b):
    M = flat.shape[0]
    n_hidden = len(fc_ws)
    out_size = last_w.shape[1]
    reg_dim = reg_w.shape[1]

    in_arrays = [flat, reg_w, reg_b.reshape(1, -1)]
    for w, b in zip(fc_ws, fc_bs):
        in_arrays += [w, b.reshape(1, -1)]
    in_arrays += [last_w, last_b.reshape(1, -1)]

    # Everything fits VMEM comfortably -> full-array blocks, single grid step.
    in_specs = [pl.BlockSpec(a.shape, lambda i: (0, 0)) for a in in_arrays]
    out_shape = (
        jax.ShapeDtypeStruct((M, out_size), flat.dtype),
        jax.ShapeDtypeStruct((M, reg_dim), flat.dtype),
    )
    out_specs = [
        pl.BlockSpec((M, out_size), lambda i: (0, 0)),
        pl.BlockSpec((M, reg_dim), lambda i: (0, 0)),
    ]

    last_out, reg_out = pl.pallas_call(
        functools.partial(_fc_head_kernel, n_hidden),
        out_shape=out_shape,
        grid=(1,),
        in_specs=in_specs,
        out_specs=out_specs,
    )(*in_arrays)
    return last_out, reg_out


# ---------------------------------------------------------------------------
# im2col glue (plain JAX, tiny at these shapes) + conv wrapper
# ---------------------------------------------------------------------------
def _im2col(x_nhwc, kh, kw, stride, pad):
    if pad:
        x_nhwc = jnp.pad(x_nhwc, ((0, 0), (pad, pad), (pad, pad), (0, 0)))
    B, H, W, C = x_nhwc.shape
    Ho = (H - kh) // stride + 1
    Wo = (W - kw) // stride + 1
    cols = []
    for di in range(kh):
        for dj in range(kw):
            cols.append(
                x_nhwc[
                    :,
                    di : di + stride * (Ho - 1) + 1 : stride,
                    dj : dj + stride * (Wo - 1) + 1 : stride,
                    :,
                ]
            )
    patches = jnp.stack(cols, axis=3)  # (B, Ho, Wo, kh*kw, C)
    return patches.reshape(B * Ho * Wo, kh * kw * C), (B, Ho, Wo)


def conv2d(x_nhwc, w_oihw, b, stride, pad, act=None):
    """PyTorch-equivalent Conv2d (OIHW weights) as a Pallas GEMM, fused bias/act."""
    Cout, Cin, KH, KW = w_oihw.shape
    patches, (B, Ho, Wo) = _im2col(x_nhwc, KH, KW, stride, pad)
    wmat = jnp.transpose(w_oihw, (2, 3, 1, 0)).reshape(KH * KW * Cin, Cout)
    out = matmul_bias_act(patches, wmat, b, act=act)
    return out.reshape(B, Ho, Wo, Cout)


# ---------------------------------------------------------------------------
# RegressCNN forward
# ---------------------------------------------------------------------------
def regress_cnn_forward(params, x_flat, input_channels, H, W, strides, paddings):
    B = x_flat.shape[0]
    conv_len = input_channels * H * W
    conv_in = x_flat[:, :conv_len]                   # input.narrow(...)
    h = conv_in.reshape(B, input_channels, H, W)     # torch .view -> NCHW
    h = jnp.transpose(h, (0, 2, 3, 1))               # NHWC for the conv GEMMs

    # apply_forward_conv: Conv2d + ReLU per layer (ReLU fused in kernel)
    for (w, b), s, p in zip(params["conv"], strides, paddings):
        h = conv2d(h, w, b, s, p, act="relu")

    # flatten exactly like torch: NCHW -> (B, C*Ho*Wo)
    flat = jnp.transpose(h, (0, 3, 1, 2)).reshape(B, -1)

    # regress_layer + hidden fc (ReLU) + last_fc, all in one fused kernel
    fc_ws = [w for w, _ in params["fc"]]
    fc_bs = [b for _, b in params["fc"]]
    last_out, regress_out = fc_head(
        flat, params["reg_w"], params["reg_b"], fc_ws, fc_bs,
        params["last_w"], params["last_b"],
    )
    return last_out, regress_out


# ---------------------------------------------------------------------------
# Deterministic synthetic parameters (shapes from the module's __init__)
# ---------------------------------------------------------------------------
def init_params(key, input_channels, n_channels, kernel_sizes, hidden_sizes,
                conv_flat_size, output_size, regress_dim, init_w=0.05):
    # init_w here is enlarged vs. the module default (1e-4) purely so the
    # numerical check below is meaningful; forward semantics are unchanged.
    keys = iter(jax.random.split(key, 64))

    def xavier(k, shape):  # torch xavier_uniform_ on (O, I, kh, kw)
        fan_in = shape[1] * shape[2] * shape[3]
        fan_out = shape[0] * shape[2] * shape[3]
        limit = float(np.sqrt(6.0 / (fan_in + fan_out)))
        return jax.random.uniform(k, shape, jnp.float32, -limit, limit)

    def unif(k, shape):
        return jax.random.uniform(k, shape, jnp.float32, -init_w, init_w)

    conv = []
    cin = input_channels
    for cout, ks in zip(n_channels, kernel_sizes):
        w = xavier(next(keys), (cout, cin, ks, ks))
        b = jnp.zeros((cout,), jnp.float32)           # conv.bias.data.fill_(0)
        conv.append((w, b))
        cin = cout

    fc = []
    fin = conv_flat_size
    for hsz in hidden_sizes:
        fc.append((unif(next(keys), (fin, hsz)), unif(next(keys), (hsz,))))
        fin = hsz

    return {
        "conv": conv,
        "fc": fc,
        "last_w": unif(next(keys), (fin, output_size)),
        "last_b": unif(next(keys), (output_size,)),
        "reg_w": unif(next(keys), (conv_flat_size, regress_dim)),
        "reg_b": unif(next(keys), (regress_dim,)),
    }


# ---------------------------------------------------------------------------
# Pure-JAX reference (XLA convs / matmuls) for a sanity check
# ---------------------------------------------------------------------------
def reference_forward(params, x_flat, C, H, W, strides, paddings):
    B = x_flat.shape[0]
    h = x_flat[:, : C * H * W].reshape(B, C, H, W)
    h = jnp.transpose(h, (0, 2, 3, 1))
    for (w, b), s, p in zip(params["conv"], strides, paddings):
        w_hwio = jnp.transpose(w, (2, 3, 1, 0))
        h = jax.lax.conv_general_dilated(
            h, w_hwio, (s, s), [(p, p), (p, p)],
            dimension_numbers=("NHWC", "HWIO", "NHWC"),
        )
        h = jax.nn.relu(h + b)
    flat = jnp.transpose(h, (0, 3, 1, 2)).reshape(B, -1)
    reg = flat @ params["reg_w"] + params["reg_b"]
    hh = flat
    for w, b in params["fc"]:
        hh = jax.nn.relu(hh @ w + b)
    last = hh @ params["last_w"] + params["last_b"]
    return last, reg


if __name__ == "__main__":
    # Small config consistent with the module: B=2, C=4, 16x16 images,
    # two conv layers (stride 2), one hidden fc layer, regress dim 1.
    B, C, H, W = 2, 4, 16, 16
    n_channels = [16, 32]
    kernel_sizes = [3, 3]
    strides = [2, 2]
    paddings = [1, 1]
    hidden_sizes = [32]
    output_size = 8
    regress_dim = 1
    conv_flat_size = 32 * (H // 4) * (W // 4)   # 32 * 4 * 4 = 512

    key = jax.random.PRNGKey(0)
    pkey, xkey = jax.random.split(key)
    params = init_params(pkey, C, n_channels, kernel_sizes, hidden_sizes,
                         conv_flat_size, output_size, regress_dim)

    # Flat input, as the module's forward expects (B, C*H*W [+ added_fc=0]).
    x_flat = jax.random.normal(xkey, (B, C * H * W), jnp.float32)

    fwd = jax.jit(
        lambda p, x: regress_cnn_forward(p, x, C, H, W, strides, paddings)
    )
    last_out, regress_out = fwd(params, x_flat)
    last_out = jax.block_until_ready(last_out)
    regress_out = jax.block_until_ready(regress_out)
    assert last_out.shape == (B, output_size), last_out.shape
    assert regress_out.shape == (B, regress_dim), regress_out.shape

    ref_last, ref_reg = reference_forward(params, x_flat, C, H, W, strides, paddings)
    ref_last = jax.block_until_ready(ref_last)
    ref_reg = jax.block_until_ready(ref_reg)
    np.testing.assert_allclose(np.asarray(last_out), np.asarray(ref_last),
                               rtol=2e-3, atol=1e-5)
    np.testing.assert_allclose(np.asarray(regress_out), np.asarray(ref_reg),
                               rtol=2e-3, atol=1e-5)

    print("KERNEL_OK")
</pallas_src>

<mosaic_0001>
module attributes {stable_mosaic.version = 11 : i64} {
  func.func @_mm_kernel_single(%arg0: i32, %arg1: i32, %arg2: memref<128x36xf32, #tpu.memory_space<vmem>>, %arg3: memref<36x16xf32, #tpu.memory_space<vmem>>, %arg4: memref<1x16xf32, #tpu.memory_space<vmem>>, %arg5: memref<128x16xf32, #tpu.memory_space<vmem>>) attributes {dimension_semantics = [#tpu.dimension_semantics<parallel>, #tpu.dimension_semantics<parallel>], iteration_bounds = array<i64: 1, 1>, scalar_prefetch = 0 : i64, scratch_operands = 0 : i64, tpu.core_type = #tpu.core_type<tc>, window_params = [{transform_indices = @transform_0, window_bounds = array<i64: 128, 36>}, {transform_indices = @transform_1, window_bounds = array<i64: 36, 16>}, {transform_indices = @transform_2, window_bounds = array<i64: 1, 16>}, {transform_indices = @transform_3, window_bounds = array<i64: 128, 16>}]} {
    %c0 = arith.constant 0 : index
    %c0_0 = arith.constant 0 : index
    %0 = vector.load %arg2[%c0, %c0_0] : memref<128x36xf32, #tpu.memory_space<vmem>>, vector<128x36xf32>
    %c0_1 = arith.constant 0 : index
    %c0_2 = arith.constant 0 : index
    %1 = vector.load %arg3[%c0_1, %c0_2] : memref<36x16xf32, #tpu.memory_space<vmem>>, vector<36x16xf32>
    %cst = arith.constant dense<0.000000e+00> : vector<128x16xf32>
    %2 = tpu.matmul %0, %1, %cst {dimension_numbers = #tpu.dot_dimension_numbers<[1], [0], [0], [1], [0, 0, 1, 1], [], []>} : vector<128x36xf32>, vector<36x16xf32>, vector<128x16xf32> -> vector<128x16xf32>
    %c0_3 = arith.constant 0 : index
    %c0_4 = arith.constant 0 : index
    %3 = vector.load %arg4[%c0_3, %c0_4] : memref<1x16xf32, #tpu.memory_space<vmem>>, vector<1x16xf32>
    %4 = vector.broadcast %3 : vector<1x16xf32> to vector<128x16xf32>
    %5 = arith.addf %2, %4 : vector<128x16xf32>
    %cst_5 = arith.constant 0.000000e+00 : f32
    %6 = vector.broadcast %cst_5 : f32 to vector<128x16xf32>
    %7 = arith.maximumf %5, %6 : vector<128x16xf32>
    %c0_6 = arith.constant 0 : index
    %c0_7 = arith.constant 0 : index
    %8 = vector.load %arg5[%c0_6, %c0_7] : memref<128x16xf32, #tpu.memory_space<vmem>>, vector<128x16xf32>
    tpu.vector_store %arg5[%c0_6, %c0_7], %7 {strides = array<i32>} : memref<128x16xf32, #tpu.memory_space<vmem>>, vector<128x16xf32>,
    return
  }
  func.func @transform_0(%arg0: i32, %arg1: i32) -> (i32, i32) {
    %c0_i32 = arith.constant 0 : i32
    %c0_i32_0 = arith.constant 0 : i32
    return %arg0, %c0_i32 : i32, i32
  }
  func.func @transform_1(%arg0: i32, %arg1: i32) -> (i32, i32) {
    %c0_i32 = arith.constant 0 : i32
    %c0_i32_0 = arith.constant 0 : i32
    return %c0_i32, %arg1 : i32, i32
  }
  func.func @transform_2(%arg0: i32, %arg1: i32) -> (i32, i32) {
    %c0_i32 = arith.constant 0 : i32
    %c0_i32_0 = arith.constant 0 : i32
    return %c0_i32, %arg1 : i32, i32
  }
  func.func @transform_3(%arg0: i32, %arg1: i32) -> (i32, i32) {
    %c0_i32 = arith.constant 0 : i32
    return %arg0, %arg1 : i32, i32
  }
}

module attributes {stable_mosaic.version = 11 : i64} {
  func.func @_mm_kernel_single(%arg0: i32, %arg1: i32, %arg2: memref<32x144xf32, #tpu.memory_space<vmem>>, %arg3: memref<144x32xf32, #tpu.memory_space<vmem>>, %arg4: memref<1x32xf32, #tpu.memory_space<vmem>>, %arg5: memref<32x32xf32, #tpu.memory_space<vmem>>) attributes {dimension_semantics = [#tpu.dimension_semantics<parallel>, #tpu.dimension_semantics<parallel>], iteration_bounds = array<i64: 1, 1>, scalar_prefetch = 0 : i64, scratch_operands = 0 : i64, tpu.core_type = #tpu.core_type<tc>, window_params = [{transform_indices = @transform_0, window_bounds = array<i64: 32, 144>}, {transform_indices = @transform_1, window_bounds = array<i64: 144, 32>}, {transform_indices = @transform_2, window_bounds = array<i64: 1, 32>}, {transform_indices = @transform_3, window_bounds = array<i64: 32, 32>}]} {
    %c0 = arith.constant 0 : index
    %c0_0 = arith.constant 0 : index
    %0 = vector.load %arg2[%c0, %c0_0] : memref<32x144xf32, #tpu.memory_space<vmem>>, vector<32x144xf32>
    %c0_1 = arith.constant 0 : index
    %c0_2 = arith.constant 0 : index
    %1 = vector.load %arg3[%c0_1, %c0_2] : memref<144x32xf32, #tpu.memory_space<vmem>>, vector<144x32xf32>
    %cst = arith.constant dense<0.000000e+00> : vector<32x32xf32>
    %2 = tpu.matmul %0, %1, %cst {dimension_numbers = #tpu.dot_dimension_numbers<[1], [0], [0], [1], [0, 0, 1, 1], [], []>} : vector<32x144xf32>, vector<144x32xf32>, vector<32x32xf32> -> vector<32x32xf32>
    %c0_3 = arith.constant 0 : index
    %c0_4 = arith.constant 0 : index
    %3 = vector.load %arg4[%c0_3, %c0_4] : memref<1x32xf32, #tpu.memory_space<vmem>>, vector<1x32xf32>
    %4 = vector.broadcast %3 : vector<1x32xf32> to vector<32x32xf32>
    %5 = arith.addf %2, %4 : vector<32x32xf32>
    %cst_5 = arith.constant 0.000000e+00 : f32
    %6 = vector.broadcast %cst_5 : f32 to vector<32x32xf32>
    %7 = arith.maximumf %5, %6 : vector<32x32xf32>
    %c0_6 = arith.constant 0 : index
    %c0_7 = arith.constant 0 : index
    %8 = vector.load %arg5[%c0_6, %c0_7] : memref<32x32xf32, #tpu.memory_space<vmem>>, vector<32x32xf32>
    tpu.vector_store %arg5[%c0_6, %c0_7], %7 {strides = array<i32>} : memref<32x32xf32, #tpu.memory_space<vmem>>, vector<32x32xf32>,
    return
  }
  func.func @transform_0(%arg0: i32, %arg1: i32) -> (i32, i32) {
    %c0_i32 = arith.constant 0 : i32
    %c0_i32_0 = arith.constant 0 : i32
    return %arg0, %c0_i32 : i32, i32
  }
  func.func @transform_1(%arg0: i32, %arg1: i32) -> (i32, i32) {
    %c0_i32 = arith.constant 0 : i32
    %c0_i32_0 = arith.constant 0 : i32
    return %c0_i32, %arg1 : i32, i32
  }
  func.func @transform_2(%arg0: i32, %arg1: i32) -> (i32, i32) {
    %c0_i32 = arith.constant 0 : i32
    %c0_i32_0 = arith.constant 0 : i32
    return %c0_i32, %arg1 : i32, i32
  }
  func.func @transform_3(%arg0: i32, %arg1: i32) -> (i32, i32) {
    %c0_i32 = arith.constant 0 : i32
    return %arg0, %arg1 : i32, i32
  }
}

module attributes {stable_mosaic.version = 11 : i64} {
  func.func @_fc_head_kernel(%arg0: i32, %arg1: memref<2x512xf32, #tpu.memory_space<vmem>>, %arg2: memref<512x1xf32, #tpu.memory_space<vmem>>, %arg3: memref<1x1xf32, #tpu.memory_space<vmem>>, %arg4: memref<512x32xf32, #tpu.memory_space<vmem>>, %arg5: memref<1x32xf32, #tpu.memory_space<vmem>>, %arg6: memref<32x8xf32, #tpu.memory_space<vmem>>, %arg7: memref<1x8xf32, #tpu.memory_space<vmem>>, %arg8: memref<2x8xf32, #tpu.memory_space<vmem>>, %arg9: memref<2x1xf32, #tpu.memory_space<vmem>>) attributes {dimension_semantics = [#tpu.dimension_semantics<arbitrary>], iteration_bounds = array<i64: 1>, scalar_prefetch = 0 : i64, scratch_operands = 0 : i64, tpu.core_type = #tpu.core_type<tc>, window_params = [{pipeline_mode = #tpu.pipeline_mode<synchronous>, transform_indices = @transform_0, window_bounds = array<i64: 2, 512>}, {pipeline_mode = #tpu.pipeline_mode<synchronous>, transform_indices = @transform_1, window_bounds = array<i64: 512, 1>}, {pipeline_mode = #tpu.pipeline_mode<synchronous>, transform_indices = @transform_2, window_bounds = array<i64: 1, 1>}, {pipeline_mode = #tpu.pipeline_mode<synchronous>, transform_indices = @transform_3, window_bounds = array<i64: 512, 32>}, {pipeline_mode = #tpu.pipeline_mode<synchronous>, transform_indices = @transform_4, window_bounds = array<i64: 1, 32>}, {pipeline_mode = #tpu.pipeline_mode<synchronous>, transform_indices = @transform_5, window_bounds = array<i64: 32, 8>}, {pipeline_mode = #tpu.pipeline_mode<synchronous>, transform_indices = @transform_6, window_bounds = array<i64: 1, 8>}, {pipeline_mode = #tpu.pipeline_mode<synchronous>, transform_indices = @transform_7, window_bounds = array<i64: 2, 8>}, {pipeline_mode = #tpu.pipeline_mode<synchronous>, transform_indices = @transform_8, window_bounds = array<i64: 2, 1>}]} {
    %c0 = arith.constant 0 : index
    %c0_0 = arith.constant 0 : index
    %0 = vector.load %arg1[%c0, %c0_0] : memref<2x512xf32, #tpu.memory_space<vmem>>, vector<2x512xf32>
    %c0_1 = arith.constant 0 : index
    %c0_2 = arith.constant 0 : index
    %1 = vector.load %arg2[%c0_1, %c0_2] : memref<512x1xf32, #tpu.memory_space<vmem>>, vector<512x1xf32>
    %cst = arith.constant dense<0.000000e+00> : vector<2x1xf32>
    %2 = tpu.matmul %0, %1, %cst {dimension_numbers = #tpu.dot_dimension_numbers<[1], [0], [0], [1], [0, 0, 1, 1], [], []>} : vector<2x512xf32>, vector<512x1xf32>, vector<2x1xf32> -> vector<2x1xf32>
    %c0_3 = arith.constant 0 : index
    %c0_4 = arith.constant 0 : index
    %3 = vector.load %arg3[%c0_3, %c0_4] : memref<1x1xf32, #tpu.memory_space<vmem>>, vector<1x1xf32>
    %4 = vector.broadcast %3 : vector<1x1xf32> to vector<2x1xf32>
    %5 = arith.addf %2, %4 : vector<2x1xf32>
    %c0_5 = arith.constant 0 : index
    %c0_6 = arith.constant 0 : index
    %6 = vector.load %arg9[%c0_5, %c0_6] : memref<2x1xf32, #tpu.memory_space<vmem>>, vector<2x1xf32>
    tpu.vector_store %arg9[%c0_5, %c0_6], %5 {strides = array<i32>} : memref<2x1xf32, #tpu.memory_space<vmem>>, vector<2x1xf32>,
    %c0_7 = arith.constant 0 : index
    %c0_8 = arith.constant 0 : index
    %7 = vector.load %arg4[%c0_7, %c0_8] : memref<512x32xf32, #tpu.memory_space<vmem>>, vector<512x32xf32>
    %c0_9 = arith.constant 0 : index
    %c0_10 = arith.constant 0 : index
    %8 = vector.load %arg5[%c0_9, %c0_10] : memref<1x32xf32, #tpu.memory_space<vmem>>, vector<1x32xf32>
    %cst_11 = arith.constant dense<0.000000e+00> : vector<2x32xf32>
    %9 = tpu.matmul %0, %7, %cst_11 {dimension_numbers = #tpu.dot_dimension_numbers<[1], [0], [0], [1], [0, 0, 1, 1], [], []>} : vector<2x512xf32>, vector<512x32xf32>, vector<2x32xf32> -> vector<2x32xf32>
    %10 = vector.broadcast %8 : vector<1x32xf32> to vector<2x32xf32>
    %11 = arith.addf %9, %10 : vector<2x32xf32>
    %cst_12 = arith.constant 0.000000e+00 : f32
    %12 = vector.broadcast %cst_12 : f32 to vector<2x32xf32>
    %13 = arith.maximumf %11, %12 : vector<2x32xf32>
    %c0_13 = arith.constant 0 : index
    %c0_14 = arith.constant 0 : index
    %14 = vector.load %arg6[%c0_13, %c0_14] : memref<32x8xf32, #tpu.memory_space<vmem>>, vector<32x8xf32>
    %cst_15 = arith.constant dense<0.000000e+00> : vector<2x8xf32>
    %15 = tpu.matmul %13, %14, %cst_15 {dimension_numbers = #tpu.dot_dimension_numbers<[1], [0], [0], [1], [0, 0, 1, 1], [], []>} : vector<2x32xf32>, vector<32x8xf32>, vector<2x8xf32> -> vector<2x8xf32>
    %c0_16 = arith.constant 0 : index
    %c0_17 = arith.constant 0 : index
    %16 = vector.load %arg7[%c0_16, %c0_17] : memref<1x8xf32, #tpu.memory_space<vmem>>, vector<1x8xf32>
    %17 = vector.broadcast %16 : vector<1x8xf32> to vector<2x8xf32>
    %18 = arith.addf %15, %17 : vector<2x8xf32>
    %c0_18 = arith.constant 0 : index
    %c0_19 = arith.constant 0 : index
    %19 = vector.load %arg8[%c0_18, %c0_19] : memref<2x8xf32, #tpu.memory_space<vmem>>, vector<2x8xf32>
    tpu.vector_store %arg8[%c0_18, %c0_19], %18 {strides = array<i32>} : memref<2x8xf32, #tpu.memory_space<vmem>>, vector<2x8xf32>,
    return
  }
  func.func @transform_0(%arg0: i32) -> (i32, i32) {
    %c0_i32 = arith.constant 0 : i32
    %c0_i32_0 = arith.constant 0 : i32
    %c0_i32_1 = arith.constant 0 : i32
    return %c0_i32, %c0_i32_0 : i32, i32
  }
  func.func @transform_1(%arg0: i32) -> (i32, i32) {
    %c0_i32 = arith.constant 0 : i32
    %c0_i32_0 = arith.constant 0 : i32
    %c0_i32_1 = arith.constant 0 : i32
    return %c0_i32, %c0_i32_0 : i32, i32
  }
  func.func @transform_2(%arg0: i32) -> (i32, i32) {
    %c0_i32 = arith.constant 0 : i32
    %c0_i32_0 = arith.constant 0 : i32
    %c0_i32_1 = arith.constant 0 : i32
    return %c0_i32, %c0_i32_0 : i32, i32
  }
  func.func @transform_3(%arg0: i32) -> (i32, i32) {
    %c0_i32 = arith.constant 0 : i32
    %c0_i32_0 = arith.constant 0 : i32
    %c0_i32_1 = arith.constant 0 : i32
    return %c0_i32, %c0_i32_0 : i32, i32
  }
  func.func @transform_4(%arg0: i32) -> (i32, i32) {
    %c0_i32 = arith.constant 0 : i32
    %c0_i32_0 = arith.constant 0 : i32
    %c0_i32_1 = arith.constant 0 : i32
    return %c0_i32, %c0_i32_0 : i32, i32
  }
  func.func @transform_5(%arg0: i32) -> (i32, i32) {
    %c0_i32 = arith.constant 0 : i32
    %c0_i32_0 = arith.constant 0 : i32
    %c0_i32_1 = arith.constant 0 : i32
    return %c0_i32, %c0_i32_0 : i32, i32
  }
  func.func @transform_6(%arg0: i32) -> (i32, i32) {
    %c0_i32 = arith.constant 0 : i32
    %c0_i32_0 = arith.constant 0 : i32
    %c0_i32_1 = arith.constant 0 : i32
    return %c0_i32, %c0_i32_0 : i32, i32
  }
  func.func @transform_7(%arg0: i32) -> (i32, i32) {
    %c0_i32 = arith.constant 0 : i32
    %c0_i32_0 = arith.constant 0 : i32
    %c0_i32_1 = arith.constant 0 : i32
    return %c0_i32, %c0_i32_0 : i32, i32
  }
  func.func @transform_8(%arg0: i32) -> (i32, i32) {
    %c0_i32 = arith.constant 0 : i32
    %c0_i32_0 = arith.constant 0 : i32
    %c0_i32_1 = arith.constant 0 : i32
    return %c0_i32, %c0_i32_0 : i32, i32
  }
}

</mosaic_0001>

<llo_original>
// kernel: _lambda_.3
$region0: #{_lambda_.3}
  #allocation0 [shape = 'u32[]', space=smem, size = 0x4, offset = 0x4, fixed_abs, tag = 'smem constant byte address 0x4 - core index']
  #allocation1 [shape = 'u32[72,128]{1,0:T(1,128)}', space=vmem, size = 0x9000, scoped, tag = 'internal scratch']
  %s0 = inlined_call_operand.vmem [shape: f32[128,36], index: 0, kind: input, shape index: {}]
  %s1 = inlined_call_operand.vmem [shape: f32[36,16], index: 1, kind: input, shape index: {}]
  %s2 = inlined_call_operand.vmem [shape: f32[1,16], index: 2, kind: input, shape index: {}]
  %s3 = inlined_call_operand.vmem [shape: f32[128,16], index: 3, kind: output, shape index: {}]
  %s4 = sld [smem:[#allocation0]]
  $region22: #{_lambda_.3} parent=0
    _
  %s6 = ssub.s32 1, %s4
  %s7 = scalar_select 0, %s6, %s4
  // Predicated region
  $region2: #{_lambda_.3} parent=0 // pred_check
    _
  $region3: #{_lambda_.3} parent=0 // pred_check_branch
    %9 = sbr.rel (0) target = $region5
  $region4: #{_lambda_.3} parent=0 // pred_region
    _
  $region5: #{_lambda_.3} parent=0 // pred_fallthru
    _
  // Predicated region
  $region6: #{_lambda_.3} parent=0 // pred_check
    _
  $region7: #{_lambda_.3} parent=0 // pred_check_branch
    %11 = sbr.rel (0) target = $region9
  $region8: #{_lambda_.3} parent=0 // pred_region
    _
  $region9: #{_lambda_.3} parent=0 // pred_fallthru
    _
  // Predicated region
  $region10: #{_lambda_.3} parent=0 // pred_check
    _
  $region11: #{_lambda_.3} parent=0 // pred_check_branch
    %13 = sbr.rel (0) target = $region13
  $region12: #{_lambda_.3} parent=0 // pred_region
    _
  $region13: #{_lambda_.3} parent=0 // pred_fallthru
    _
  %v14 = vld [vmem:[%s0] sm:$0xff]
  %v15 = vld [vmem:[%s0 + $0x8] sm:$0xff]
  %v16 = vld [vmem:[%s0 + $0x10] sm:$0xff]
  %v17 = vld [vmem:[%s0 + $0x18] sm:$0xff]
  %v18 = vld [vmem:[%s0 + $0x20] sm:$0xff]
  %v19 = vld [vmem:[%s0 + $0x28] sm:$0xff]
  %v20 = vld [vmem:[%s0 + $0x30] sm:$0xff]
  %v21 = vld [vmem:[%s0 + $0x38] sm:$0xff]
  %v22 = vld [vmem:[%s0 + $0x40] sm:$0xff]
  %v23 = vld [vmem:[%s0 + $0x48] sm:$0xff]
  %v24 = vld [vmem:[%s0 + $0x50] sm:$0xff]
  %v25 = vld [vmem:[%s0 + $0x58] sm:$0xff]
  %v26 = vld [vmem:[%s0 + $0x60] sm:$0xff]
  %v27 = vld [vmem:[%s0 + $0x68] sm:$0xff]
  %v28 = vld [vmem:[%s0 + $0x70] sm:$0xff]
  %v29 = vld [vmem:[%s0 + $0x78] sm:$0xff]
  %v30 = vld [vmem:[%s1] sm:$0xff]
  %v31 = vld [vmem:[%s1 + $0x8] sm:$0xff]
  %v32 = vld [vmem:[%s1 + $0x10] sm:$0xff]
  %v33 = vld [vmem:[%s1 + $0x18] sm:$0xff]
  %v34 = vld [vmem:[%s1 + $0x20] sm:$0xf]
  %v35 = vld [vmem:[%s2] sm:$0x1]
  %v37 = vperm.slane %v35, 0
  %vm39 = vcmask 293888
  %v41 = vsel %vm39, %v14, 0
  %v44 = vsel %vm39, %v15, 0
  %v47 = vsel %vm39, %v16, 0
  %v50 = vsel %vm39, %v17, 0
  %v53 = vsel %vm39, %v18, 0
  %v56 = vsel %vm39, %v19, 0
  %v59 = vsel %vm39, %v20, 0
  %v62 = vsel %vm39, %v21, 0
  %v65 = vsel %vm39, %v22, 0
  %v68 = vsel %vm39, %v23, 0
  %v71 = vsel %vm39, %v24, 0
  %v74 = vsel %vm39, %v25, 0
  %v77 = vsel %vm39, %v26, 0
  %v80 = vsel %vm39, %v27, 0
  %v83 = vsel %vm39, %v28, 0
  %v86 = vsel %vm39, %v29, 0
  %vm88 = vcmask 1043456
  %v90 = vsel %vm88, %v34, 0
  %92 = vmatpush.msra.mxu0 0.0
  %93 = vmatpush.msra.mxu0 0.0
  %94 = vmatpush.msra.mxu0 0.0
  %95 = vmatpush.msra.mxu0 0.0
  %96 = vmatpush.msra.mxu0 0.0
  %97 = vmatpush.msra.mxu0 0.0
  %98 = vmatpush.msra.mxu0 0.0
  %99 = vmatpush.msra.mxu0 0.0
  %100 = vmatpush.msra.mxu0 0.0
  %101 = vmatpush.msra.mxu0 0.0
  %102 = vmatpush.msra.mxu0 0.0
  %103 = vmatpush.msra.mxu0 %v90
  %104 = vmatpush.msra.mxu0 %v33
  %105 = vmatpush.msra.mxu0 %v32
  %106 = vmatpush.msra.mxu0 %v31
  %107 = vmatpush.msra.mxu0 %v30
  %108 = vmatmul.f32.gmra.mxu0 %v41
  %v109 = vpop.f32.mrf.mxu0
  %v110 = vadd.f32 %v37, %v109
  %111 = vmatmul.f32.gmra.mxu0 %v44
  %v112 = vpop.f32.mrf.mxu0
  %v113 = vadd.f32 %v37, %v112
  %114 = vmatmul.f32.gmra.mxu0 %v47
  %v115 = vpop.f32.mrf.mxu0
  %v116 = vadd.f32 %v37, %v115
  %117 = vmatmul.f32.gmra.mxu0 %v50
  %v118 = vpop.f32.mrf.mxu0
  %v119 = vadd.f32 %v37, %v118
  %120 = vmatmul.f32.gmra.mxu0 %v53
  %v121 = vpop.f32.mrf.mxu0
  %v122 = vadd.f32 %v37, %v121
  %123 = vmatmul.f32.gmra.mxu0 %v56
  %v124 = vpop.f32.mrf.mxu0
  %v125 = vadd.f32 %v37, %v124
  %126 = vmatmul.f32.gmra.mxu0 %v59
  %v127 = vpop.f32.mrf.mxu0
  %v128 = vadd.f32 %v37, %v127
  %129 = vmatmul.f32.gmra.mxu0 %v62
  %v130 = vpop.f32.mrf.mxu0
  %v131 = vadd.f32 %v37, %v130
  %132 = vmatmul.f32.gmra.mxu0 %v65
  %v133 = vpop.f32.mrf.mxu0
  %v134 = vadd.f32 %v37, %v133
  %135 = vmatmul.f32.gmra.mxu0 %v68
  %v136 = vpop.f32.mrf.mxu0
  %v137 = vadd.f32 %v37, %v136
  %138 = vmatmul.f32.gmra.mxu0 %v71
  %v139 = vpop.f32.mrf.mxu0
  %v140 = vadd.f32 %v37, %v139
  %141 = vmatmul.f32.gmra.mxu0 %v74
  %v142 = vpop.f32.mrf.mxu0
  %v143 = vadd.f32 %v37, %v142
  %144 = vmatmul.f32.gmra.mxu0 %v77
  %v145 = vpop.f32.mrf.mxu0
  %v146 = vadd.f32 %v37, %v145
  %147 = vmatmul.f32.gmra.mxu0 %v80
  %v148 = vpop.f32.mrf.mxu0
  %v149 = vadd.f32 %v37, %v148
  %150 = vmatmul.f32.gmra.mxu0 %v83
  %v151 = vpop.f32.mrf.mxu0
  %v152 = vadd.f32 %v37, %v151
  %153 = vmatmul.f32.gmra.mxu0 %v86
  %v154 = vpop.f32.mrf.mxu0
  %v155 = vadd.f32 %v37, %v154
  %156 = vdwg.mxu0
  %v157 = vmax.f32 %v110, 0.0
  %v158 = vmax.f32 %v113, 0.0
  %v159 = vmax.f32 %v116, 0.0
  %v160 = vmax.f32 %v119, 0.0
  %v161 = vmax.f32 %v122, 0.0
  %v162 = vmax.f32 %v125, 0.0
  %v163 = vmax.f32 %v128, 0.0
  %v164 = vmax.f32 %v131, 0.0
  %v165 = vmax.f32 %v134, 0.0
  %v166 = vmax.f32 %v137, 0.0
  %v167 = vmax.f32 %v140, 0.0
  %v168 = vmax.f32 %v143, 0.0
  %v169 = vmax.f32 %v146, 0.0
  %v170 = vmax.f32 %v149, 0.0
  %v171 = vmax.f32 %v152, 0.0
  %v172 = vmax.f32 %v155, 0.0
  %vm173 = vcmask 130048
  %174 = vst.msk [vmem:[%s3] sm:$0xff] %vm173, %v157
  %175 = vst.msk [vmem:[%s3 + $0x8] sm:$0xff] %vm173, %v158
  %176 = vst.msk [vmem:[%s3 + $0x10] sm:$0xff] %vm173, %v159
  %177 = vst.msk [vmem:[%s3 + $0x18] sm:$0xff] %vm173, %v160
  %178 = vst.msk [vmem:[%s3 + $0x20] sm:$0xff] %vm173, %v161
  %179 = vst.msk [vmem:[%s3 + $0x28] sm:$0xff] %vm173, %v162
  %180 = vst.msk [vmem:[%s3 + $0x30] sm:$0xff] %vm173, %v163
  %181 = vst.msk [vmem:[%s3 + $0x38] sm:$0xff] %vm173, %v164
  %182 = vst.msk [vmem:[%s3 + $0x40] sm:$0xff] %vm173, %v165
  %183 = vst.msk [vmem:[%s3 + $0x48] sm:$0xff] %vm173, %v166
  %184 = vst.msk [vmem:[%s3 + $0x50] sm:$0xff] %vm173, %v167
  %185 = vst.msk [vmem:[%s3 + $0x58] sm:$0xff] %vm173, %v168
  %186 = vst.msk [vmem:[%s3 + $0x60] sm:$0xff] %vm173, %v169
  %187 = vst.msk [vmem:[%s3 + $0x68] sm:$0xff] %vm173, %v170
  %188 = vst.msk [vmem:[%s3 + $0x70] sm:$0xff] %vm173, %v171
  %189 = vst.msk [vmem:[%s3 + $0x78] sm:$0xff] %vm173, %v172
  // Predicated region
  $region14: #{_lambda_.3} parent=0 // pred_check
    _
  $region15: #{_lambda_.3} parent=0 // pred_check_branch
    %191 = sbr.rel (0) target = $region17
  $region16: #{_lambda_.3} parent=0 // pred_region
    _
  $region17: #{_lambda_.3} parent=0 // pred_fallthru
    _
  // Predicated region
  $region18: #{_lambda_.3} parent=0 // pred_check
    _
  $region19: #{_lambda_.3} parent=0 // pred_check_branch
    %193 = sbr.rel (0) target = $region21
  $region20: #{_lambda_.3} parent=0 // pred_region
    _
  $region21: #{_lambda_.3} parent=0 // pred_fallthru
    _

// kernel: _lambda_.4
$region0: #{_lambda_.4}
  #allocation0 [shape = 'u32[]', space=smem, size = 0x4, offset = 0x4, fixed_abs, tag = 'smem constant byte address 0x4 - core index']
  #allocation1 [shape = 'u32[72,128]{1,0:T(1,128)}', space=vmem, size = 0x9000, scoped, tag = 'internal scratch']
  %s0 = inlined_call_operand.vmem [shape: f32[32,144], index: 0, kind: input, shape index: {}]
  %s1 = inlined_call_operand.vmem [shape: f32[144,32], index: 1, kind: input, shape index: {}]
  %s2 = inlined_call_operand.vmem [shape: f32[1,32], index: 2, kind: input, shape index: {}]
  %s3 = inlined_call_operand.vmem [shape: f32[32,32], index: 3, kind: output, shape index: {}]
  %s4 = sld [smem:[#allocation0]]
  $region22: #{_lambda_.4} parent=0
    _
  %s6 = ssub.s32 1, %s4
  %s7 = scalar_select 0, %s6, %s4
  // Predicated region
  $region2: #{_lambda_.4} parent=0 // pred_check
    _
  $region3: #{_lambda_.4} parent=0 // pred_check_branch
    %9 = sbr.rel (0) target = $region5
  $region4: #{_lambda_.4} parent=0 // pred_region
    _
  $region5: #{_lambda_.4} parent=0 // pred_fallthru
    _
  // Predicated region
  $region6: #{_lambda_.4} parent=0 // pred_check
    _
  $region7: #{_lambda_.4} parent=0 // pred_check_branch
    %11 = sbr.rel (0) target = $region9
  $region8: #{_lambda_.4} parent=0 // pred_region
    _
  $region9: #{_lambda_.4} parent=0 // pred_fallthru
    _
  // Predicated region
  $region10: #{_lambda_.4} parent=0 // pred_check
    _
  $region11: #{_lambda_.4} parent=0 // pred_check_branch
    %13 = sbr.rel (0) target = $region13
  $region12: #{_lambda_.4} parent=0 // pred_region
    _
  $region13: #{_lambda_.4} parent=0 // pred_fallthru
    _
  %v14 = vld [vmem:[%s0] sm:$0xff]
  %v15 = vld [vmem:[%s0 + $0x8] sm:$0xff]
  %v16 = vld [vmem:[%s0 + $0x10] sm:$0xff]
  %v17 = vld [vmem:[%s0 + $0x18] sm:$0xff]
  %v18 = vld [vmem:[%s0 + $0x20] sm:$0xff]
  %v19 = vld [vmem:[%s0 + $0x28] sm:$0xff]
  %v20 = vld [vmem:[%s0 + $0x30] sm:$0xff]
  %v21 = vld [vmem:[%s0 + $0x38] sm:$0xff]
  %v22 = vld [vmem:[%s1] sm:$0xff]
  %v23 = vld [vmem:[%s1 + $0x8] sm:$0xff]
  %v24 = vld [vmem:[%s1 + $0x10] sm:$0xff]
  %v25 = vld [vmem:[%s1 + $0x18] sm:$0xff]
  %v26 = vld [vmem:[%s1 + $0x20] sm:$0xff]
  %v27 = vld [vmem:[%s1 + $0x28] sm:$0xff]
  %v28 = vld [vmem:[%s1 + $0x30] sm:$0xff]
  %v29 = vld [vmem:[%s1 + $0x38] sm:$0xff]
  %v30 = vld [vmem:[%s1 + $0x40] sm:$0xff]
  %v31 = vld [vmem:[%s1 + $0x48] sm:$0xff]
  %v32 = vld [vmem:[%s1 + $0x50] sm:$0xff]
  %v33 = vld [vmem:[%s1 + $0x58] sm:$0xff]
  %v34 = vld [vmem:[%s1 + $0x60] sm:$0xff]
  %v35 = vld [vmem:[%s1 + $0x68] sm:$0xff]
  %v36 = vld [vmem:[%s1 + $0x70] sm:$0xff]
  %v37 = vld [vmem:[%s1 + $0x78] sm:$0xff]
  %v38 = vld [vmem:[%s1 + $0x80] sm:$0xff]
  %v39 = vld [vmem:[%s1 + $0x88] sm:$0xff]
  %v40 = vld [vmem:[%s2] sm:$0x1]
  %v42 = vperm.slane %v40, 0
  %vm44 = vcmask 130048
  %v46 = vsel %vm44, %v15, 0
  %v49 = vsel %vm44, %v17, 0
  %v52 = vsel %vm44, %v19, 0
  %v55 = vsel %vm44, %v21, 0
  %57 = vmatpush.msra.mxu0 %v37
  %58 = vmatpush.msra.mxu0 %v36
  %59 = vmatpush.msra.mxu0 %v35
  %60 = vmatpush.msra.mxu0 %v34
  %61 = vmatpush.msra.mxu0 %v33
  %62 = vmatpush.msra.mxu0 %v32
  %63 = vmatpush.msra.mxu0 %v31
  %64 = vmatpush.msra.mxu0 %v30
  %65 = vmatpush.msra.mxu0 %v29
  %66 = vmatpush.msra.mxu0 %v28
  %67 = vmatpush.msra.mxu0 %v27
  %68 = vmatpush.msra.mxu0 %v26
  %69 = vmatpush.msra.mxu0 %v25
  %70 = vmatpush.msra.mxu0 %v24
  %71 = vmatpush.msra.mxu0 %v23
  %72 = vmatpush.msra.mxu0 %v22
  %73 = vmatmul.f32.gmra.mxu0 %v14
  %v74 = vpop.f32.mrf.mxu0
  %v75 = vadd.f32 %v42, %v74
  %76 = vmatmul.f32.gmra.mxu0 %v16
  %v77 = vpop.f32.mrf.mxu0
  %v78 = vadd.f32 %v42, %v77
  %79 = vmatmul.f32.gmra.mxu0 %v18
  %v80 = vpop.f32.mrf.mxu0
  %v81 = vadd.f32 %v42, %v80
  %82 = vmatmul.f32.gmra.mxu0 %v20
  %v83 = vpop.f32.mrf.mxu0
  %v84 = vadd.f32 %v42, %v83
  %85 = vdwg.mxu0
  %86 = vmatpush.msra.mxu0 0.0
  %87 = vmatpush.msra.mxu0 0.0
  %88 = vmatpush.msra.mxu0 0.0
  %89 = vmatpush.msra.mxu0 0.0
  %90 = vmatpush.msra.mxu0 0.0
  %91 = vmatpush.msra.mxu0 0.0
  %92 = vmatpush.msra.mxu0 0.0
  %93 = vmatpush.msra.mxu0 0.0
  %94 = vmatpush.msra.mxu0 0.0
  %95 = vmatpush.msra.mxu0 0.0
  %96 = vmatpush.msra.mxu0 0.0
  %97 = vmatpush.msra.mxu0 0.0
  %98 = vmatpush.msra.mxu0 0.0
  %99 = vmatpush.msra.mxu0 0.0
  %100 = vmatpush.msra.mxu0 %v39
  %101 = vmatpush.msra.mxu0 %v38
  %102 = vmatmul.f32.gmra.mxu0 %v46
  %v103 = vpop.f32.mrf.mxu0
  %v104 = vadd.f32 %v75, %v103
  %105 = vmatmul.f32.gmra.mxu0 %v49
  %v106 = vpop.f32.mrf.mxu0
  %v107 = vadd.f32 %v78, %v106
  %108 = vmatmul.f32.gmra.mxu0 %v52
  %v109 = vpop.f32.mrf.mxu0
  %v110 = vadd.f32 %v81, %v109
  %111 = vmatmul.f32.gmra.mxu0 %v55
  %v112 = vpop.f32.mrf.mxu0
  %v113 = vadd.f32 %v84, %v112
  %114 = vdwg.mxu0
  %v115 = vmax.f32 %v104, 0.0
  %v116 = vmax.f32 %v107, 0.0
  %v117 = vmax.f32 %v110, 0.0
  %v118 = vmax.f32 %v113, 0.0
  %vm119 = vcmask 261120
  %120 = vst.msk [vmem:[%s3] sm:$0xff] %vm119, %v115
  %121 = vst.msk [vmem:[%s3 + $0x8] sm:$0xff] %vm119, %v116
  %122 = vst.msk [vmem:[%s3 + $0x10] sm:$0xff] %vm119, %v117
  %123 = vst.msk [vmem:[%s3 + $0x18] sm:$0xff] %vm119, %v118
  // Predicated region
  $region14: #{_lambda_.4} parent=0 // pred_check
    _
  $region15: #{_lambda_.4} parent=0 // pred_check_branch
    %125 = sbr.rel (0) target = $region17
  $region16: #{_lambda_.4} parent=0 // pred_region
    _
  $region17: #{_lambda_.4} parent=0 // pred_fallthru
    _
  // Predicated region
  $region18: #{_lambda_.4} parent=0 // pred_check
    _
  $region19: #{_lambda_.4} parent=0 // pred_check_branch
    %127 = sbr.rel (0) target = $region21
  $region20: #{_lambda_.4} parent=0 // pred_region
    _
  $region21: #{_lambda_.4} parent=0 // pred_fallthru
    _

// kernel: _lambda_.5
$region0: #{_lambda_.5}
  #allocation0 [shape = 'u32[]', space=smem, size = 0x4, offset = 0x4, fixed_abs, tag = 'smem constant byte address 0x4 - core index']
  #allocation1 [shape = 'u32[72,128]{1,0:T(1,128)}', space=vmem, size = 0x9000, scoped, tag = 'internal scratch']
  #allocation2 [shape = 'f32[1,1]{1,0:T(1,128)S(1)}', space=vmem, size = 0x200, scoped, tag = 'scoped memory for _lambda_.5']
  %s0 = inlined_call_operand.vmem [shape: f32[2,512], index: 0, kind: input, shape index: {}]
  %s1 = inlined_call_operand.vmem [shape: f32[512,1], index: 1, kind: input, shape index: {}]
  %s2 = inlined_call_operand.<no memory space> [shape: f32[1,1], index: 2, kind: input, shape index: {}]
  %s3 = inlined_call_operand.vmem [shape: f32[512,32], index: 3, kind: input, shape index: {}]
  %s4 = inlined_call_operand.vmem [shape: f32[1,32], index: 4, kind: input, shape index: {}]
  %s5 = inlined_call_operand.vmem [shape: f32[32,8], index: 5, kind: input, shape index: {}]
  %s6 = inlined_call_operand.vmem [shape: f32[1,8], index: 6, kind: input, shape index: {}]
  %s7 = inlined_call_operand.hbm [shape: f32[2,8], index: 7, kind: output, shape index: {0}]
  %s8 = inlined_call_operand.vmem [shape: f32[2,1], index: 8, kind: output, shape index: {1}]
  %9 = xla_tuple %s7, %s8
  %s10 = sld [smem:[#allocation0]]
  $region46: #{_lambda_.5} parent=0
    _
  %s12 = ssub.s32 1, %s10
  %s13 = scalar_select 0, %s12, %s10
  %v14 = vstv %s2
  %15 = vst [vmem:[#allocation2] sm:$0x1] %v14
  $region1: #{_lambda_.5} parent=0
    #allocation3 [shape = 'u8[1024]{0}', space=vmem, size = 0x400, scoped, tag = 'output window, operand 0, single buffered']
    #allocation4 [shape = 's32[1]{0}', space=sflag, size = 0x4, scoped, tag = 'scoped memory for _lambda_.5']
    %16 = vsyncpa [#allocation4], 0
    // Predicated region
    $region2: #{_lambda_.5} parent=1 // pred_check
      _
    $region3: #{_lambda_.5} parent=1 // pred_check_branch
      %18 = sbr.rel (0) target = $region5
    $region4: #{_lambda_.5} parent=1 // pred_region
      _
    $region5: #{_lambda_.5} parent=1 // pred_fallthru
      _
    // Predicated region
    $region6: #{_lambda_.5} parent=1 // pred_check
      _
    $region7: #{_lambda_.5} parent=1 // pred_check_branch
      %20 = sbr.rel (0) target = $region9
    $region8: #{_lambda_.5} parent=1 // pred_region
      _
    $region9: #{_lambda_.5} parent=1 // pred_fallthru
      _
    // Predicated region
    $region10: #{_lambda_.5} parent=1 // pred_check
      _
    $region11: #{_lambda_.5} parent=1 // pred_check_branch
      %22 = sbr.rel (0) target = $region13
    $region12: #{_lambda_.5} parent=1 // pred_region
      _
    $region13: #{_lambda_.5} parent=1 // pred_fallthru
      _
    // Predicated region
    $region14: #{_lambda_.5} parent=1 // pred_check
      _
    $region15: #{_lambda_.5} parent=1 // pred_check_branch
      %24 = sbr.rel (0) target = $region17
    $region16: #{_lambda_.5} parent=1 // pred_region
      _
    $region17: #{_lambda_.5} parent=1 // pred_fallthru
      _
    // Predicated region
    $region18: #{_lambda_.5} parent=1 // pred_check
      _
    $region19: #{_lambda_.5} parent=1 // pred_check_branch
      %26 = sbr.rel (0) target = $region21
    $region20: #{_lambda_.5} parent=1 // pred_region
      _
    $region21: #{_lambda_.5} parent=1 // pred_fallthru
      _
    // Predicated region
    $region22: #{_lambda_.5} parent=1 // pred_check
      _
    $region23: #{_lambda_.5} parent=1 // pred_check_branch
      %28 = sbr.rel (0) target = $region25
    $region24: #{_lambda_.5} parent=1 // pred_region
      _
    $region25: #{_lambda_.5} parent=1 // pred_fallthru
      _
    // Predicated region
    $region26: #{_lambda_.5} parent=1 // pred_check
      _
    $region27: #{_lambda_.5} parent=1 // pred_check_branch
      %30 = sbr.rel (0) target = $region29
    $region28: #{_lambda_.5} parent=1 // pred_region
      _
    $region29: #{_lambda_.5} parent=1 // pred_fallthru
      _
    %v31 = vld [vmem:[%s0] sm:$0xff]
    %v32 = vld [vmem:[%s1] sm:$0xff]
    %v33 = vld [vmem:[%s1 + $0x8] sm:$0xff]
    %v34 = vld [vmem:[%s1 + $0x10] sm:$0xff]
    %v35 = vld [vmem:[%s1 + $0x18] sm:$0xff]
    %v36 = vld [vmem:[%s1 + $0x20] sm:$0xff]
    %v37 = vld [vmem:[%s1 + $0x28] sm:$0xff]
    %v38 = vld [vmem:[%s1 + $0x30] sm:$0xff]
    %v39 = vld [vmem:[%s1 + $0x38] sm:$0xff]
    %v40 = vld [vmem:[%s1 + $0x40] sm:$0xff]
    %v41 = vld [vmem:[%s1 + $0x48] sm:$0xff]
    %v42 = vld [vmem:[%s1 + $0x50] sm:$0xff]
    %v43 = vld [vmem:[%s1 + $0x58] sm:$0xff]
    %v44 = vld [vmem:[%s1 + $0x60] sm:$0xff]
    %v45 = vld [vmem:[%s1 + $0x68] sm:$0xff]
    %v46 = vld [vmem:[%s1 + $0x70] sm:$0xff]
    %v47 = vld [vmem:[%s1 + $0x78] sm:$0xff]
    %v48 = vld [vmem:[%s1 + $0x80] sm:$0xff]
    %v49 = vld [vmem:[%s1 + $0x88] sm:$0xff]
    %v50 = vld [vmem:[%s1 + $0x90] sm:$0xff]
    %v51 = vld [vmem:[%s1 + $0x98] sm:$0xff]
    %v52 = vld [vmem:[%s1 + $0xa0] sm:$0xff]
    %v53 = vld [vmem:[%s1 + $0xa8] sm:$0xff]
    %v54 = vld [vmem:[%s1 + $0xb0] sm:$0xff]
    %v55 = vld [vmem:[%s1 + $0xb8] sm:$0xff]
    %v56 = vld [vmem:[%s1 + $0xc0] sm:$0xff]
    %v57 = vld [vmem:[%s1 + $0xc8] sm:$0xff]
    %v58 = vld [vmem:[%s1 + $0xd0] sm:$0xff]
    %v59 = vld [vmem:[%s1 + $0xd8] sm:$0xff]
    %v60 = vld [vmem:[%s1 + $0xe0] sm:$0xff]
    %v61 = vld [vmem:[%s1 + $0xe8] sm:$0xff]
    %v62 = vld [vmem:[%s1 + $0xf0] sm:$0xff]
    %v63 = vld [vmem:[%s1 + $0xf8] sm:$0xff]
    %v64 = vld [vmem:[%s1 + $0x100] sm:$0xff]
    %v65 = vld [vmem:[%s1 + $0x108] sm:$0xff]
    %v66 = vld [vmem:[%s1 + $0x110] sm:$0xff]
    %v67 = vld [vmem:[%s1 + $0x118] sm:$0xff]
    %v68 = vld [vmem:[%s1 + $0x120] sm:$0xff]
    %v69 = vld [vmem:[%s1 + $0x128] sm:$0xff]
    %v70 = vld [vmem:[%s1 + $0x130] sm:$0xff]
    %v71 = vld [vmem:[%s1 + $0x138] sm:$0xff]
    %v72 = vld [vmem:[%s1 + $0x140] sm:$0xff]
    %v73 = vld [vmem:[%s1 + $0x148] sm:$0xff]
    %v74 = vld [vmem:[%s1 + $0x150] sm:$0xff]
    %v75 = vld [vmem:[%s1 + $0x158] sm:$0xff]
    %v76 = vld [vmem:[%s1 + $0x160] sm:$0xff]
    %v77 = vld [vmem:[%s1 + $0x168] sm:$0xff]
    %v78 = vld [vmem:[%s1 + $0x170] sm:$0xff]
    %v79 = vld [vmem:[%s1 + $0x178] sm:$0xff]
    %v80 = vld [vmem:[%s1 + $0x180] sm:$0xff]
    %v81 = vld [vmem:[%s1 + $0x188] sm:$0xff]
    %v82 = vld [vmem:[%s1 + $0x190] sm:$0xff]
    %v83 = vld [vmem:[%s1 + $0x198] sm:$0xff]
    %v84 = vld [vmem:[%s1 + $0x1a0] sm:$0xff]
    %v85 = vld [vmem:[%s1 + $0x1a8] sm:$0xff]
    %v86 = vld [vmem:[%s1 + $0x1b0] sm:$0xff]
    %v87 = vld [vmem:[%s1 + $0x1b8] sm:$0xff]
    %v88 = vld [vmem:[%s1 + $0x1c0] sm:$0xff]
    %v89 = vld [vmem:[%s1 + $0x1c8] sm:$0xff]
    %v90 = vld [vmem:[%s1 + $0x1d0] sm:$0xff]
    %v91 = vld [vmem:[%s1 + $0x1d8] sm:$0xff]
    %v92 = vld [vmem:[%s1 + $0x1e0] sm:$0xff]
    %v93 = vld [vmem:[%s1 + $0x1e8] sm:$0xff]
    %v94 = vld [vmem:[%s1 + $0x1f0] sm:$0xff]
    %v95 = vld [vmem:[%s1 + $0x1f8] sm:$0xff]
    %v96 = vld [vmem:[#allocation2] sm:$0x1]
    %v98 = vperm.slane %v96, 0
    %101 = vst [vmem:[#allocation1] ss:$4 sm:$0xff] %v31
    %v102 = vld.sshfl [vmem:[#allocation1] sm:$0xff pattern:$0x73625140]
    %v103 = vld.sshfl [vmem:[#allocation1 + $0x8] sm:$0xff pattern:$0x73625140]
    %v104 = vld.sshfl [vmem:[#allocation1 + $0x10] sm:$0xff pattern:$0x73625140]
    %v105 = vld.sshfl [vmem:[#allocation1 + $0x18] sm:$0xff pattern:$0x73625140]
    %110 = vmatpush.msra.mxu0 %v47
    %111 = vmatpush.msra.mxu0 %v46
    %112 = vmatpush.msra.mxu0 %v45
    %113 = vmatpush.msra.mxu0 %v44
    %114 = vmatpush.msra.mxu0 %v43
    %115 = vmatpush.msra.mxu0 %v42
    %116 = vmatpush.msra.mxu0 %v41
    %117 = vmatpush.msra.mxu0 %v40
    %118 = vmatpush.msra.mxu0 %v39
    %119 = vmatpush.msra.mxu0 %v38
    %120 = vmatpush.msra.mxu0 %v37
    %121 = vmatpush.msra.mxu0 %v36
    %122 = vmatpush.msra.mxu0 %v35
    %123 = vmatpush.msra.mxu0 %v34
    %124 = vmatpush.msra.mxu0 %v33
    %125 = vmatpush.msra.mxu0 %v32
    %126 = vmatmul.f32.gmra.mxu0 %v102
    %v127 = vpop.f32.mrf.mxu0
    %v128 = vadd.f32 %v98, %v127
    %129 = vdwg.mxu0
    %130 = vmatpush.msra.mxu0 %v63
    %131 = vmatpush.msra.mxu0 %v62
    %132 = vmatpush.msra.mxu0 %v61
    %133 = vmatpush.msra.mxu0 %v60
    %134 = vmatpush.msra.mxu0 %v59
    %135 = vmatpush.msra.mxu0 %v58
    %136 = vmatpush.msra.mxu0 %v57
    %137 = vmatpush.msra.mxu0 %v56
    %138 = vmatpush.msra.mxu0 %v55
    %139 = vmatpush.msra.mxu0 %v54
    %140 = vmatpush.msra.mxu0 %v53
    %141 = vmatpush.msra.mxu0 %v52
    %142 = vmatpush.msra.mxu0 %v51
    %143 = vmatpush.msra.mxu0 %v50
    %144 = vmatpush.msra.mxu0 %v49
    %145 = vmatpush.msra.mxu0 %v48
    %146 = vmatmul.f32.gmra.mxu0 %v103
    %v147 = vpop.f32.mrf.mxu0
    %v148 = vadd.f32 %v128, %v147
    %149 = vdwg.mxu0
    %150 = vmatpush.msra.mxu0 %v79
    %151 = vmatpush.msra.mxu0 %v78
    %152 = vmatpush.msra.mxu0 %v77
    %153 = vmatpush.msra.mxu0 %v76
    %154 = vmatpush.msra.mxu0 %v75
    %155 = vmatpush.msra.mxu0 %v74
    %156 = vmatpush.msra.mxu0 %v73
    %157 = vmatpush.msra.mxu0 %v72
    %158 = vmatpush.msra.mxu0 %v71
    %159 = vmatpush.msra.mxu0 %v70
    %160 = vmatpush.msra.mxu0 %v69
    %161 = vmatpush.msra.mxu0 %v68
    %162 = vmatpush.msra.mxu0 %v67
    %163 = vmatpush.msra.mxu0 %v66
    %164 = vmatpush.msra.mxu0 %v65
    %165 = vmatpush.msra.mxu0 %v64
    %166 = vmatmul.f32.gmra.mxu0 %v104
    %v167 = vpop.f32.mrf.mxu0
    %v168 = vadd.f32 %v148, %v167
    %169 = vdwg.mxu0
    %170 = vmatpush.msra.mxu0 %v95
    %171 = vmatpush.msra.mxu0 %v94
    %172 = vmatpush.msra.mxu0 %v93
    %173 = vmatpush.msra.mxu0 %v92
    %174 = vmatpush.msra.mxu0 %v91
    %175 = vmatpush.msra.mxu0 %v90
    %176 = vmatpush.msra.mxu0 %v89
    %177 = vmatpush.msra.mxu0 %v88
    %178 = vmatpush.msra.mxu0 %v87
    %179 = vmatpush.msra.mxu0 %v86
    %180 = vmatpush.msra.mxu0 %v85
    %181 = vmatpush.msra.mxu0 %v84
    %182 = vmatpush.msra.mxu0 %v83
    %183 = vmatpush.msra.mxu0 %v82
    %184 = vmatpush.msra.mxu0 %v81
    %185 = vmatpush.msra.mxu0 %v80
    %186 = vmatmul.f32.gmra.mxu0 %v105
    %v187 = vpop.f32.mrf.mxu0
    %v188 = vadd.f32 %v168, %v187
    %189 = vdwg.mxu0
    %vm190 = vcmask 1024
    %191 = vst.msk [vmem:[%s8] sm:$0x3] %vm190, %v188
    %v192 = vld [vmem:[%s3] sm:$0xff]
    %v193 = vld [vmem:[%s3 + $0x8] sm:$0xff]
    %v194 = vld [vmem:[%s3 + $0x10] sm:$0xff]
    %v195 = vld [vmem:[%s3 + $0x18] sm:$0xff]
    %v196 = vld [vmem:[%s3 + $0x20] sm:$0xff]
    %v197 = vld [vmem:[%s3 + $0x28] sm:$0xff]
    %v198 = vld [vmem:[%s3 + $0x30] sm:$0xff]
    %v199 = vld [vmem:[%s3 + $0x38] sm:$0xff]
    %v200 = vld [vmem:[%s3 + $0x40] sm:$0xff]
    %v201 = vld [vmem:[%s3 + $0x48] sm:$0xff]
    %v202 = vld [vmem:[%s3 + $0x50] sm:$0xff]
    %v203 = vld [vmem:[%s3 + $0x58] sm:$0xff]
    %v204 = vld [vmem:[%s3 + $0x60] sm:$0xff]
    %v205 = vld [vmem:[%s3 + $0x68] sm:$0xff]
    %v206 = vld [vmem:[%s3 + $0x70] sm:$0xff]
    %v207 = vld [vmem:[%s3 + $0x78] sm:$0xff]
    %v208 = vld [vmem:[%s3 + $0x80] sm:$0xff]
    %v209 = vld [vmem:[%s3 + $0x88] sm:$0xff]
    %v210 = vld [vmem:[%s3 + $0x90] sm:$0xff]
    %v211 = vld [vmem:[%s3 + $0x98] sm:$0xff]
    %v212 = vld [vmem:[%s3 + $0xa0] sm:$0xff]
    %v213 = vld [vmem:[%s3 + $0xa8] sm:$0xff]
    %v214 = vld [vmem:[%s3 + $0xb0] sm:$0xff]
    %v215 = vld [vmem:[%s3 + $0xb8] sm:$0xff]
    %v216 = vld [vmem:[%s3 + $0xc0] sm:$0xff]
    %v217 = vld [vmem:[%s3 + $0xc8] sm:$0xff]
    %v218 = vld [vmem:[%s3 + $0xd0] sm:$0xff]
    %v219 = vld [vmem:[%s3 + $0xd8] sm:$0xff]
    %v220 = vld [vmem:[%s3 + $0xe0] sm:$0xff]
    %v221 = vld [vmem:[%s3 + $0xe8] sm:$0xff]
    %v222 = vld [vmem:[%s3 + $0xf0] sm:$0xff]
    %v223 = vld [vmem:[%s3 + $0xf8] sm:$0xff]
    %v224 = vld [vmem:[%s3 + $0x100] sm:$0xff]
    %v225 = vld [vmem:[%s3 + $0x108] sm:$0xff]
    %v226 = vld [vmem:[%s3 + $0x110] sm:$0xff]
    %v227 = vld [vmem:[%s3 + $0x118] sm:$0xff]
    %v228 = vld [vmem:[%s3 + $0x120] sm:$0xff]
    %v229 = vld [vmem:[%s3 + $0x128] sm:$0xff]
    %v230 = vld [vmem:[%s3 + $0x130] sm:$0xff]
    %v231 = vld [vmem:[%s3 + $0x138] sm:$0xff]
    %v232 = vld [vmem:[%s3 + $0x140] sm:$0xff]
    %v233 = vld [vmem:[%s3 + $0x148] sm:$0xff]
    %v234 = vld [vmem:[%s3 + $0x150] sm:$0xff]
    %v235 = vld [vmem:[%s3 + $0x158] sm:$0xff]
    %v236 = vld [vmem:[%s3 + $0x160] sm:$0xff]
    %v237 = vld [vmem:[%s3 + $0x168] sm:$0xff]
    %v238 = vld [vmem:[%s3 + $0x170] sm:$0xff]
    %v239 = vld [vmem:[%s3 + $0x178] sm:$0xff]
    %v240 = vld [vmem:[%s3 + $0x180] sm:$0xff]
    %v241 = vld [vmem:[%s3 + $0x188] sm:$0xff]
    %v242 = vld [vmem:[%s3 + $0x190] sm:$0xff]
    %v243 = vld [vmem:[%s3 + $0x198] sm:$0xff]
    %v244 = vld [vmem:[%s3 + $0x1a0] sm:$0xff]
    %v245 = vld [vmem:[%s3 + $0x1a8] sm:$0xff]
    %v246 = vld [vmem:[%s3 + $0x1b0] sm:$0xff]
    %v247 = vld [vmem:[%s3 + $0x1b8] sm:$0xff]
    %v248 = vld [vmem:[%s3 + $0x1c0] sm:$0xff]
    %v249 = vld [vmem:[%s3 + $0x1c8] sm:$0xff]
    %v250 = vld [vmem:[%s3 + $0x1d0] sm:$0xff]
    %v251 = vld [vmem:[%s3 + $0x1d8] sm:$0xff]
    %v252 = vld [vmem:[%s3 + $0x1e0] sm:$0xff]
    %v253 = vld [vmem:[%s3 + $0x1e8] sm:$0xff]
    %v254 = vld [vmem:[%s3 + $0x1f0] sm:$0xff]
    %v255 = vld [vmem:[%s3 + $0x1f8] sm:$0xff]
    %v256 = vld [vmem:[%s4] sm:$0x1]
    %v258 = vperm.slane %v256, 0
    %260 = vst [vmem:[#allocation1] ss:$4 sm:$0xff] %v31
    %v261 = vld.sshfl [vmem:[#allocation1] sm:$0xff pattern:$0x73625140]
    %v262 = vld.sshfl [vmem:[#allocation1 + $0x8] sm:$0xff pattern:$0x73625140]
    %v263 = vld.sshfl [vmem:[#allocation1 + $0x10] sm:$0xff pattern:$0x73625140]
    %v264 = vld.sshfl [vmem:[#allocation1 + $0x18] sm:$0xff pattern:$0x73625140]
    %269 = vmatpush.msra.mxu0 %v207
    %270 = vmatpush.msra.mxu0 %v206
    %271 = vmatpush.msra.mxu0 %v205
    %272 = vmatpush.msra.mxu0 %v204
    %273 = vmatpush.msra.mxu0 %v203
    %274 = vmatpush.msra.mxu0 %v202
    %275 = vmatpush.msra.mxu0 %v201
    %276 = vmatpush.msra.mxu0 %v200
    %277 = vmatpush.msra.mxu0 %v199
    %278 = vmatpush.msra.mxu0 %v198
    %279 = vmatpush.msra.mxu0 %v197
    %280 = vmatpush.msra.mxu0 %v196
    %281 = vmatpush.msra.mxu0 %v195
    %282 = vmatpush.msra.mxu0 %v194
    %283 = vmatpush.msra.mxu0 %v193
    %284 = vmatpush.msra.mxu0 %v192
    %285 = vmatmul.f32.gmra.mxu0 %v261
    %v286 = vpop.f32.mrf.mxu0
    %v287 = vadd.f32 %v258, %v286
    %288 = vdwg.mxu0
    %289 = vmatpush.msra.mxu0 %v223
    %290 = vmatpush.msra.mxu0 %v222
    %291 = vmatpush.msra.mxu0 %v221
    %292 = vmatpush.msra.mxu0 %v220
    %293 = vmatpush.msra.mxu0 %v219
    %294 = vmatpush.msra.mxu0 %v218
    %295 = vmatpush.msra.mxu0 %v217
    %296 = vmatpush.msra.mxu0 %v216
    %297 = vmatpush.msra.mxu0 %v215
    %298 = vmatpush.msra.mxu0 %v214
    %299 = vmatpush.msra.mxu0 %v213
    %300 = vmatpush.msra.mxu0 %v212
    %301 = vmatpush.msra.mxu0 %v211
    %302 = vmatpush.msra.mxu0 %v210
    %303 = vmatpush.msra.mxu0 %v209
    %304 = vmatpush.msra.mxu0 %v208
    %305 = vmatmul.f32.gmra.mxu0 %v262
    %v306 = vpop.f32.mrf.mxu0
    %v307 = vadd.f32 %v287, %v306
    %308 = vdwg.mxu0
    %309 = vmatpush.msra.mxu0 %v239
    %310 = vmatpush.msra.mxu0 %v238
    %311 = vmatpush.msra.mxu0 %v237
    %312 = vmatpush.msra.mxu0 %v236
    %313 = vmatpush.msra.mxu0 %v235
    %314 = vmatpush.msra.mxu0 %v234
    %315 = vmatpush.msra.mxu0 %v233
    %316 = vmatpush.msra.mxu0 %v232
    %317 = vmatpush.msra.mxu0 %v231
    %318 = vmatpush.msra.mxu0 %v230
    %319 = vmatpush.msra.mxu0 %v229
    %320 = vmatpush.msra.mxu0 %v228
    %321 = vmatpush.msra.mxu0 %v227
    %322 = vmatpush.msra.mxu0 %v226
    %323 = vmatpush.msra.mxu0 %v225
    %324 = vmatpush.msra.mxu0 %v224
    %325 = vmatmul.f32.gmra.mxu0 %v263
    %v326 = vpop.f32.mrf.mxu0
    %v327 = vadd.f32 %v307, %v326
    %328 = vdwg.mxu0
    %329 = vmatpush.msra.mxu0 %v255
    %330 = vmatpush.msra.mxu0 %v254
    %331 = vmatpush.msra.mxu0 %v253
    %332 = vmatpush.msra.mxu0 %v252
    %333 = vmatpush.msra.mxu0 %v251
    %334 = vmatpush.msra.mxu0 %v250
    %335 = vmatpush.msra.mxu0 %v249
    %336 = vmatpush.msra.mxu0 %v248
    %337 = vmatpush.msra.mxu0 %v247
    %338 = vmatpush.msra.mxu0 %v246
    %339 = vmatpush.msra.mxu0 %v245
    %340 = vmatpush.msra.mxu0 %v244
    %341 = vmatpush.msra.mxu0 %v243
    %342 = vmatpush.msra.mxu0 %v242
    %343 = vmatpush.msra.mxu0 %v241
    %344 = vmatpush.msra.mxu0 %v240
    %345 = vmatmul.f32.gmra.mxu0 %v264
    %v346 = vpop.f32.mrf.mxu0
    %v347 = vadd.f32 %v327, %v346
    %348 = vdwg.mxu0
    %v349 = vmax.f32 %v347, 0.0
    %v350 = vld [vmem:[%s5] sm:$0xff]
    %v351 = vld [vmem:[%s5 + $0x8] sm:$0xff]
    %v352 = vld [vmem:[%s5 + $0x10] sm:$0xff]
    %v353 = vld [vmem:[%s5 + $0x18] sm:$0xff]
    %v354 = vld [vmem:[%s6] sm:$0x1]
    %v356 = vperm.slane %v354, 0
    %vm358 = vcmask 261120
    %v360 = vsel %vm358, %v349, 0
    %362 = vmatpush.msra.mxu0 0.0
    %363 = vmatpush.msra.mxu0 0.0
    %364 = vmatpush.msra.mxu0 0.0
    %365 = vmatpush.msra.mxu0 0.0
    %366 = vmatpush.msra.mxu0 0.0
    %367 = vmatpush.msra.mxu0 0.0
    %368 = vmatpush.msra.mxu0 0.0
    %369 = vmatpush.msra.mxu0 0.0
    %370 = vmatpush.msra.mxu0 0.0
    %371 = vmatpush.msra.mxu0 0.0
    %372 = vmatpush.msra.mxu0 0.0
    %373 = vmatpush.msra.mxu0 0.0
    %374 = vmatpush.msra.mxu0 %v353
    %375 = vmatpush.msra.mxu0 %v352
    %376 = vmatpush.msra.mxu0 %v351
    %377 = vmatpush.msra.mxu0 %v350
    %378 = vmatmul.f32.gmra.mxu0 %v360
    %v379 = vpop.f32.mrf.mxu0
    %v380 = vadd.f32 %v356, %v379
    %381 = vdwg.mxu0
    %vm382 = vcmask 58368
    %383 = vst.msk [vmem:[#allocation3] sm:$0x3] %vm382, %v380
    // Predicated region
    $region30: #{_lambda_.5} parent=1 // pred_check
      _
    $region31: #{_lambda_.5} parent=1 // pred_check_branch
      %385 = sbr.rel (0) target = $region33
    $region32: #{_lambda_.5} parent=1 // pred_region
      %387 = vsyncadd [#allocation4], 0
      %s389 = sshll.u32 [#allocation3], 4
      %s390 = int_to_ptr.vmem [resolvable:$true] %s389
      %s391 = sshll.u32 %s7, 4
      %s392 = int_to_ptr.hbm [resolvable:$true] %s391
      %394 = dma.vmem_to_hbm [thread:$0]  %s390, 32, %s392, [#allocation4]
    $region33: #{_lambda_.5} parent=1 // pred_fallthru
      _
    // Predicated region
    $region34: #{_lambda_.5} parent=1 // pred_check
      _
    $region35: #{_lambda_.5} parent=1 // pred_check_branch
      %396 = sbr.rel (0) target = $region37
    $region36: #{_lambda_.5} parent=1 // pred_region
      _
    $region37: #{_lambda_.5} parent=1 // pred_fallthru
      _
    // Predicated region
    $region38: #{_lambda_.5} parent=1 // pred_check
      _
    $region39: #{_lambda_.5} parent=1 // pred_check_branch
      %398 = sbr.rel (0) target = $region41
    $region40: #{_lambda_.5} parent=1 // pred_region
      %400 = dma.done [#allocation4], 32
    $region41: #{_lambda_.5} parent=1 // pred_fallthru
      _
    // Predicated region
    $region42: #{_lambda_.5} parent=1 // pred_check
      _
    $region43: #{_lambda_.5} parent=1 // pred_check_branch
      %402 = sbr.rel (0) target = $region45
    $region44: #{_lambda_.5} parent=1 // pred_region
      _
    $region45: #{_lambda_.5} parent=1 // pred_fallthru
      _
    %403 = vsyncpa [#allocation4], 1

</llo_original>
